<compile_context>
chip_gen: v7x
topology: tpu7x:2x2x1
jax: 0.10.0
libtpu: 0.0.40
codegen_flags: <defaults>
</compile_context>

<pallas_src>
import functools

import jax
import jax.numpy as jnp
import numpy as np
from jax.experimental import pallas as pl
from jax.experimental.pallas import tpu as pltpu


# -------------------- Pallas kernel --------------------

def encoder_kernel(
    x_ref, eps_ref,          # data: [B, x_dim], [B, z_dim]
    w1_ref, bn_ref,          # linear weight [x_dim, h_dim]; packed [b1; gamma; beta] -> [3, h_dim]
    ws_ref, bs_ref,          # fused sample heads: [h_dim, 2*z_dim], [1, 2*z_dim]
    out_ref,                 # packed output slab: [B, h_dim + 3*z_dim]
    *, h_dim, z_dim,
):
    x = x_ref[...]

    # ---- linear -> BatchNorm1d (batch statistics) -> LeakyReLU(0.1) ----
    h = jnp.dot(x, w1_ref[...], preferred_element_type=jnp.float32) + bn_ref[0:1, :]
    mean = jnp.mean(h, axis=0, keepdims=True)
    var = jnp.mean((h - mean) ** 2, axis=0, keepdims=True)          # biased variance
    h = (h - mean) * jax.lax.rsqrt(var + 1e-5) * bn_ref[1:2, :] + bn_ref[2:3, :]
    h = jnp.where(h >= 0.0, h, 0.1 * h)

    # ---- GaussianSample: fused mu|log_var heads in one MXU matmul ----
    s = jnp.dot(h, ws_ref[...], preferred_element_type=jnp.float32) + bs_ref[...]
    mu = s[:, :z_dim]
    lv_raw = s[:, z_dim:]
    # F.softplus with default threshold=20
    log_var = jnp.where(lv_raw > 20.0, lv_raw,
                        jnp.log1p(jnp.exp(jnp.minimum(lv_raw, 20.0))))
    z = mu + jnp.exp(0.5 * log_var) * eps_ref[...]

    # ---- single output slab: [ h | z | mu | log_var ] ----
    out_ref[:, :h_dim] = h
    out_ref[:, h_dim:h_dim + z_dim] = z
    out_ref[:, h_dim + z_dim:h_dim + 2 * z_dim] = mu
    out_ref[:, h_dim + 2 * z_dim:] = log_var


# -------------------- wrapper --------------------

def encoder_forward(params, x, *, key):
    """Mirrors Encoder.forward: returns (h, (z, mu, log_var))."""
    B = x.shape[0]
    h_dim = params["w_lin"].shape[0]
    z_dim = params["w_mu"].shape[0]
    eps = jax.random.normal(key, (B, z_dim), jnp.float32)

    # parameter packing (done outside the kernel; weights pre-transposed to [in, out])
    w1 = params["w_lin"].T                                                   # [x_dim, h_dim]
    bn_pack = jnp.concatenate(
        [params["b_lin"], params["gamma"], params["beta"]], axis=0)          # [3, h_dim]
    ws = jnp.concatenate([params["w_mu"].T, params["w_lv"].T], axis=1)       # [h_dim, 2*z_dim]
    bs = jnp.concatenate([params["b_mu"], params["b_lv"]], axis=1)           # [1, 2*z_dim]

    vmem = pl.BlockSpec(memory_space=pltpu.MemorySpace.VMEM)
    slab = pl.pallas_call(
        functools.partial(encoder_kernel, h_dim=h_dim, z_dim=z_dim),
        out_shape=jax.ShapeDtypeStruct((B, h_dim + 3 * z_dim), jnp.float32),
        in_specs=[vmem] * 6,
        out_specs=vmem,
    )(x, eps, w1, bn_pack, ws, bs)

    h = slab[:, :h_dim]
    z = slab[:, h_dim:h_dim + z_dim]
    mu = slab[:, h_dim + z_dim:h_dim + 2 * z_dim]
    log_var = slab[:, h_dim + 2 * z_dim:]
    return h, (z, mu, log_var)


# -------------------- deterministic parameter init --------------------

def _linear_init(key, out_f, in_f):
    kw, kb = jax.random.split(key)
    bound = 1.0 / np.sqrt(in_f)
    w = jax.random.uniform(kw, (out_f, in_f), jnp.float32, -bound, bound)
    b = jax.random.uniform(kb, (1, out_f), jnp.float32, -bound, bound)
    return w, b


def make_params(key, dims):
    x_dim, h_dim, z_dim = dims
    ks = jax.random.split(key, 3)
    w_lin, b_lin = _linear_init(ks[0], h_dim, x_dim)
    w_mu, b_mu = _linear_init(ks[1], z_dim, h_dim)
    w_lv, b_lv = _linear_init(ks[2], z_dim, h_dim)
    return dict(
        w_lin=w_lin, b_lin=b_lin,
        gamma=jnp.ones((1, h_dim), jnp.float32),
        beta=jnp.zeros((1, h_dim), jnp.float32),
        w_mu=w_mu, b_mu=b_mu, w_lv=w_lv, b_lv=b_lv,
    )


# -------------------- pure-JAX reference (for correctness check) --------------------

def _ref_forward(params, x, eps):
    h = x @ params["w_lin"].T + params["b_lin"]
    m = h.mean(0, keepdims=True)
    v = ((h - m) ** 2).mean(0, keepdims=True)
    h = (h - m) / jnp.sqrt(v + 1e-5) * params["gamma"] + params["beta"]
    h = jnp.where(h >= 0.0, h, 0.1 * h)
    mu = h @ params["w_mu"].T + params["b_mu"]
    log_var = jax.nn.softplus(h @ params["w_lv"].T + params["b_lv"])
    z = mu + jnp.exp(0.5 * log_var) * eps
    return h, z, mu, log_var


# -------------------- main --------------------

if __name__ == "__main__":
    dims = [32, 16, 8]   # [x_dim, h_dim, z_dim]
    B = 8

    root = jax.random.PRNGKey(0)
    k_param, k_x, k_eps = jax.random.split(root, 3)

    params = make_params(k_param, dims)
    x = jax.random.normal(k_x, (B, dims[0]), jnp.float32)

    h, (z, mu, log_var) = encoder_forward(params, x, key=k_eps)
    jax.block_until_ready((h, z, mu, log_var))

    # verify against a pure-JAX reference using the same epsilon draw
    eps = jax.random.normal(k_eps, (B, dims[2]), jnp.float32)
    ref = _ref_forward(params, x, eps)
    for got, want in zip((h, z, mu, log_var), ref):
        np.testing.assert_allclose(np.asarray(got), np.asarray(want),
                                   rtol=1e-5, atol=1e-5)

    print("KERNEL_OK")
</pallas_src>

<mosaic_0001>
module attributes {stable_mosaic.version = 11 : i64} {
  func.func @encoder_kernel(%arg0: memref<8x32xf32, #tpu.memory_space<vmem>>, %arg1: memref<8x8xf32, #tpu.memory_space<vmem>>, %arg2: memref<32x16xf32, #tpu.memory_space<vmem>>, %arg3: memref<3x16xf32, #tpu.memory_space<vmem>>, %arg4: memref<16x16xf32, #tpu.memory_space<vmem>>, %arg5: memref<1x16xf32, #tpu.memory_space<vmem>>, %arg6: memref<8x40xf32, #tpu.memory_space<vmem>>) attributes {dimension_semantics = [], scalar_prefetch = 0 : i64, scratch_operands = 0 : i64, tpu.core_type = #tpu.core_type<tc>} {
    %c0 = arith.constant 0 : index
    %c0_0 = arith.constant 0 : index
    %0 = vector.load %arg0[%c0, %c0_0] : memref<8x32xf32, #tpu.memory_space<vmem>>, vector<8x32xf32>
    %c0_1 = arith.constant 0 : index
    %c0_2 = arith.constant 0 : index
    %1 = vector.load %arg2[%c0_1, %c0_2] : memref<32x16xf32, #tpu.memory_space<vmem>>, vector<32x16xf32>
    %cst = arith.constant dense<0.000000e+00> : vector<8x16xf32>
    %2 = tpu.matmul %0, %1, %cst {dimension_numbers = #tpu.dot_dimension_numbers<[1], [0], [0], [1], [0, 0, 1, 1], [], []>} : vector<8x32xf32>, vector<32x16xf32>, vector<8x16xf32> -> vector<8x16xf32>
    %c0_3 = arith.constant 0 : index
    %c0_4 = arith.constant 0 : index
    %3 = vector.load %arg3[%c0_3, %c0_4] : memref<3x16xf32, #tpu.memory_space<vmem>>, vector<1x16xf32>
    %4 = vector.broadcast %3 : vector<1x16xf32> to vector<8x16xf32>
    %5 = arith.addf %2, %4 : vector<8x16xf32>
    %cst_5 = arith.constant dense<0.000000e+00> : vector<16xf32>
    %6 = vector.multi_reduction <add>, %5, %cst_5 [0] : vector<8x16xf32> to vector<16xf32>
    %7 = vector.shape_cast %6 : vector<16xf32> to vector<1x16xf32>
    %cst_6 = arith.constant 8.000000e+00 : f32
    %8 = vector.broadcast %cst_6 : f32 to vector<1x16xf32>
    %9 = arith.divf %7, %8 : vector<1x16xf32>
    %10 = vector.broadcast %9 : vector<1x16xf32> to vector<8x16xf32>
    %11 = arith.subf %5, %10 : vector<8x16xf32>
    %12 = arith.mulf %11, %11 : vector<8x16xf32>
    %cst_7 = arith.constant dense<0.000000e+00> : vector<16xf32>
    %13 = vector.multi_reduction <add>, %12, %cst_7 [0] : vector<8x16xf32> to vector<16xf32>
    %14 = vector.shape_cast %13 : vector<16xf32> to vector<1x16xf32>
    %cst_8 = arith.constant 8.000000e+00 : f32
    %15 = vector.broadcast %cst_8 : f32 to vector<1x16xf32>
    %16 = arith.divf %14, %15 : vector<1x16xf32>
    %17 = vector.broadcast %9 : vector<1x16xf32> to vector<8x16xf32>
    %18 = arith.subf %5, %17 : vector<8x16xf32>
    %cst_9 = arith.constant 9.99999974E-6 : f32
    %19 = vector.broadcast %cst_9 : f32 to vector<1x16xf32>
    %20 = arith.addf %16, %19 : vector<1x16xf32>
    %21 = math.rsqrt %20 : vector<1x16xf32>
    %22 = vector.broadcast %21 : vector<1x16xf32> to vector<8x16xf32>
    %23 = arith.mulf %18, %22 : vector<8x16xf32>
    %c1 = arith.constant 1 : index
    %c0_10 = arith.constant 0 : index
    %24 = vector.load %arg3[%c1, %c0_10] : memref<3x16xf32, #tpu.memory_space<vmem>>, vector<1x16xf32>
    %25 = vector.broadcast %24 : vector<1x16xf32> to vector<8x16xf32>
    %26 = arith.mulf %23, %25 : vector<8x16xf32>
    %c2 = arith.constant 2 : index
    %c0_11 = arith.constant 0 : index
    %27 = vector.load %arg3[%c2, %c0_11] : memref<3x16xf32, #tpu.memory_space<vmem>>, vector<1x16xf32>
    %28 = vector.broadcast %27 : vector<1x16xf32> to vector<8x16xf32>
    %29 = arith.addf %26, %28 : vector<8x16xf32>
    %cst_12 = arith.constant 0.000000e+00 : f32
    %30 = vector.broadcast %cst_12 : f32 to vector<8x16xf32>
    %31 = arith.cmpf oge, %29, %30 : vector<8x16xf32>
    %cst_13 = arith.constant 1.000000e-01 : f32
    %32 = vector.broadcast %cst_13 : f32 to vector<8x16xf32>
    %33 = arith.mulf %32, %29 : vector<8x16xf32>
    %34 = arith.select %31, %29, %33 : vector<8x16xi1>, vector<8x16xf32>
    %c0_14 = arith.constant 0 : index
    %c0_15 = arith.constant 0 : index
    %35 = vector.load %arg4[%c0_14, %c0_15] : memref<16x16xf32, #tpu.memory_space<vmem>>, vector<16x16xf32>
    %cst_16 = arith.constant dense<0.000000e+00> : vector<8x16xf32>
    %36 = tpu.matmul %34, %35, %cst_16 {dimension_numbers = #tpu.dot_dimension_numbers<[1], [0], [0], [1], [0, 0, 1, 1], [], []>} : vector<8x16xf32>, vector<16x16xf32>, vector<8x16xf32> -> vector<8x16xf32>
    %c0_17 = arith.constant 0 : index
    %c0_18 = arith.constant 0 : index
    %37 = vector.load %arg5[%c0_17, %c0_18] : memref<1x16xf32, #tpu.memory_space<vmem>>, vector<1x16xf32>
    %38 = vector.broadcast %37 : vector<1x16xf32> to vector<8x16xf32>
    %39 = arith.addf %36, %38 : vector<8x16xf32>
    %40 = vector.extract_strided_slice %39 {offsets = [0, 0], sizes = [8, 8], strides = [1, 1]} : vector<8x16xf32> to vector<8x8xf32>
    %41 = vector.extract_strided_slice %39 {offsets = [0, 8], sizes = [8, 8], strides = [1, 1]} : vector<8x16xf32> to vector<8x8xf32>
    %cst_19 = arith.constant 2.000000e+01 : f32
    %42 = vector.broadcast %cst_19 : f32 to vector<8x8xf32>
    %43 = arith.cmpf ogt, %41, %42 : vector<8x8xf32>
    %cst_20 = arith.constant 2.000000e+01 : f32
    %44 = vector.broadcast %cst_20 : f32 to vector<8x8xf32>
    %45 = arith.minimumf %41, %44 : vector<8x8xf32>
    %46 = math.exp %45 : vector<8x8xf32>
    %47 = math.log1p %46 : vector<8x8xf32>
    %48 = arith.select %43, %41, %47 : vector<8x8xi1>, vector<8x8xf32>
    %cst_21 = arith.constant 5.000000e-01 : f32
    %49 = vector.broadcast %cst_21 : f32 to vector<8x8xf32>
    %50 = arith.mulf %49, %48 : vector<8x8xf32>
    %51 = math.exp %50 : vector<8x8xf32>
    %c0_22 = arith.constant 0 : index
    %c0_23 = arith.constant 0 : index
    %52 = vector.load %arg1[%c0_22, %c0_23] : memref<8x8xf32, #tpu.memory_space<vmem>>, vector<8x8xf32>
    %53 = arith.mulf %51, %52 : vector<8x8xf32>
    %54 = arith.addf %40, %53 : vector<8x8xf32>
    %c0_24 = arith.constant 0 : index
    %c0_25 = arith.constant 0 : index
    %55 = vector.load %arg6[%c0_24, %c0_25] : memref<8x40xf32, #tpu.memory_space<vmem>>, vector<8x16xf32>
    tpu.vector_store %arg6[%c0_24, %c0_25], %34 {strides = array<i32>} : memref<8x40xf32, #tpu.memory_space<vmem>>, vector<8x16xf32>,
    %c0_26 = arith.constant 0 : index
    %c16 = arith.constant 16 : index
    %56 = vector.load %arg6[%c0_26, %c16] : memref<8x40xf32, #tpu.memory_space<vmem>>, vector<8x8xf32>
    tpu.vector_store %arg6[%c0_26, %c16], %54 {strides = array<i32>} : memref<8x40xf32, #tpu.memory_space<vmem>>, vector<8x8xf32>,
    %c0_27 = arith.constant 0 : index
    %c24 = arith.constant 24 : index
    %57 = vector.load %arg6[%c0_27, %c24] : memref<8x40xf32, #tpu.memory_space<vmem>>, vector<8x8xf32>
    tpu.vector_store %arg6[%c0_27, %c24], %40 {strides = array<i32>} : memref<8x40xf32, #tpu.memory_space<vmem>>, vector<8x8xf32>,
    %c0_28 = arith.constant 0 : index
    %c32 = arith.constant 32 : index
    %58 = vector.load %arg6[%c0_28, %c32] : memref<8x40xf32, #tpu.memory_space<vmem>>, vector<8x8xf32>
    tpu.vector_store %arg6[%c0_28, %c32], %48 {strides = array<i32>} : memref<8x40xf32, #tpu.memory_space<vmem>>, vector<8x8xf32>,
    return
  }
}

</mosaic_0001>

<llo_original>
// kernel: tpu_custom_call.1
$region0: #{tpu_custom_call.1}
  #allocation0 [shape = 'u32[]', space=smem, size = 0x4, offset = 0x4, fixed_abs, tag = 'smem constant byte address 0x4 - core index']
  #allocation1 [shape = 'u32[144,128]{1,0:T(1,128)}', space=vmem, size = 0x12000, scoped, tag = 'internal scratch']
  %s0 = inlined_call_operand.vmem [shape: f32[8,32], index: 0, kind: input, shape index: {}]
  %s1 = inlined_call_operand.vmem [shape: f32[8,8], index: 1, kind: input, shape index: {}]
  %s2 = inlined_call_operand.vmem [shape: f32[32,16], index: 2, kind: input, shape index: {}]
  %s3 = inlined_call_operand.vmem [shape: f32[3,16], index: 3, kind: input, shape index: {}]
  %s4 = inlined_call_operand.vmem [shape: f32[16,16], index: 4, kind: input, shape index: {}]
  %s5 = inlined_call_operand.vmem [shape: f32[1,16], index: 5, kind: input, shape index: {}]
  %s6 = inlined_call_operand.hbm [shape: f32[8,40], index: 6, kind: output, shape index: {}]
  %s7 = sld [smem:[#allocation0]]
  $region34: #{tpu_custom_call.1} parent=0
    _
  %s9 = ssub.s32 1, %s7
  %s10 = scalar_select 0, %s9, %s7
  $region1: #{tpu_custom_call.1} parent=0
    #allocation2 [shape = 'u8[4096]{0}', space=vmem, size = 0x1000, scoped, tag = 'output window, operand 0, single buffered']
    #allocation3 [shape = 's32[1]{0}', space=sflag, size = 0x4, scoped, tag = 'scoped memory for tpu_custom_call.1']
    %11 = vsyncpa [#allocation3], 0
    // Predicated region
    $region2: #{tpu_custom_call.1} parent=1 // pred_check
      _
    $region3: #{tpu_custom_call.1} parent=1 // pred_check_branch
      %13 = sbr.rel (0) target = $region5
    $region4: #{tpu_custom_call.1} parent=1 // pred_region
      _
    $region5: #{tpu_custom_call.1} parent=1 // pred_fallthru
      _
    // Predicated region
    $region6: #{tpu_custom_call.1} parent=1 // pred_check
      _
    $region7: #{tpu_custom_call.1} parent=1 // pred_check_branch
      %15 = sbr.rel (0) target = $region9
    $region8: #{tpu_custom_call.1} parent=1 // pred_region
      _
    $region9: #{tpu_custom_call.1} parent=1 // pred_fallthru
      _
    // Predicated region
    $region10: #{tpu_custom_call.1} parent=1 // pred_check
      _
    $region11: #{tpu_custom_call.1} parent=1 // pred_check_branch
      %17 = sbr.rel (0) target = $region13
    $region12: #{tpu_custom_call.1} parent=1 // pred_region
      _
    $region13: #{tpu_custom_call.1} parent=1 // pred_fallthru
      _
    // Predicated region
    $region14: #{tpu_custom_call.1} parent=1 // pred_check
      _
    $region15: #{tpu_custom_call.1} parent=1 // pred_check_branch
      %19 = sbr.rel (0) target = $region17
    $region16: #{tpu_custom_call.1} parent=1 // pred_region
      _
    $region17: #{tpu_custom_call.1} parent=1 // pred_fallthru
      _
    // Predicated region
    $region18: #{tpu_custom_call.1} parent=1 // pred_check
      _
    $region19: #{tpu_custom_call.1} parent=1 // pred_check_branch
      %21 = sbr.rel (0) target = $region21
    $region20: #{tpu_custom_call.1} parent=1 // pred_region
      _
    $region21: #{tpu_custom_call.1} parent=1 // pred_fallthru
      _
    // Predicated region
    $region22: #{tpu_custom_call.1} parent=1 // pred_check
      _
    $region23: #{tpu_custom_call.1} parent=1 // pred_check_branch
      %23 = sbr.rel (0) target = $region25
    $region24: #{tpu_custom_call.1} parent=1 // pred_region
      _
    $region25: #{tpu_custom_call.1} parent=1 // pred_fallthru
      _
    %v24 = vld [vmem:[%s0] sm:$0xff]
    %v25 = vld [vmem:[%s2] sm:$0xff]
    %v26 = vld [vmem:[%s2 + $0x8] sm:$0xff]
    %v27 = vld [vmem:[%s2 + $0x10] sm:$0xff]
    %v28 = vld [vmem:[%s2 + $0x18] sm:$0xff]
    %v29 = vld [vmem:[%s3] sm:$0x1]
    %v30 = vlaneseq
    %v31 = vshrl.u32 %v30, 7
    %v32 = vsub.s32 0, %v31
    %v33 = vrot.slane %v29, %v32
    %vm34 = vcmask 261120
    %v36 = vsel %vm34, %v24, 0
    %38 = vmatprep.subr.mxu0 0.0
    %39 = vmatpush1.msra.mxu0 %v25
    %40 = vmatprep.subr.mxu0 0.0
    %41 = vmatpush1.msra.mxu0 %v26
    %42 = vmatprep.subr.mxu0 0.0
    %43 = vmatpush1.msra.mxu0 %v27
    %44 = vmatprep.subr.mxu0 0.0
    %45 = vmatpush1.msra.mxu0 %v28
    %46 = vmatprep.subr.mxu0 0.0
    %47 = vmatpush1.msra.mxu0 0.0
    %48 = vmatprep.subr.mxu0 0.0
    %49 = vmatpush1.msra.mxu0 0.0
    %50 = vmatprep.subr.mxu0 0.0
    %51 = vmatpush1.msra.mxu0 0.0
    %52 = vmatprep.subr.mxu0 0.0
    %53 = vmatpush1.msra.mxu0 0.0
    %54 = vmatprep.subr.mxu0 0.0
    %55 = vmatpush1.msra.mxu0 0.0
    %56 = vmatprep.subr.mxu0 0.0
    %57 = vmatpush1.msra.mxu0 0.0
    %58 = vmatprep.subr.mxu0 0.0
    %59 = vmatpush1.msra.mxu0 0.0
    %60 = vmatprep.subr.mxu0 0.0
    %61 = vmatpush1.msra.mxu0 0.0
    %62 = vmatprep.subr.mxu0 0.0
    %63 = vmatpush1.msra.mxu0 0.0
    %64 = vmatprep.subr.mxu0 0.0
    %65 = vmatpush1.msra.mxu0 0.0
    %66 = vmatprep.subr.mxu0 0.0
    %67 = vmatpush1.msra.mxu0 0.0
    %68 = vmatprep.subr.mxu0 0.0
    %69 = vmatpush1.msra.mxu0 0.0
    %70 = vmatprep.subr.mxu0 0.0
    %71 = vmatpush1.msra.mxu0 0.0
    %72 = vmatprep.subr.mxu0 0.0
    %73 = vmatpush1.msra.mxu0 0.0
    %74 = vmatprep.subr.mxu0 0.0
    %75 = vmatpush1.msra.mxu0 0.0
    %76 = vmatprep.subr.mxu0 0.0
    %77 = vmatpush1.msra.mxu0 0.0
    %78 = vmatprep.subr.mxu0 0.0
    %79 = vmatpush1.msra.mxu0 0.0
    %80 = vmatprep.subr.mxu0 0.0
    %81 = vmatpush1.msra.mxu0 0.0
    %82 = vmatprep.subr.mxu0 0.0
    %83 = vmatpush1.msra.mxu0 0.0
    %84 = vmatprep.subr.mxu0 0.0
    %85 = vmatpush1.msra.mxu0 0.0
    %86 = vmatprep.subr.mxu0 0.0
    %87 = vmatpush1.msra.mxu0 0.0
    %88 = vmatprep.subr.mxu0 0.0
    %89 = vmatpush1.msra.mxu0 0.0
    %90 = vmatprep.subr.mxu0 0.0
    %91 = vmatpush1.msra.mxu0 0.0
    %92 = vmatprep.subr.mxu0 0.0
    %93 = vmatpush1.msra.mxu0 0.0
    %94 = vmatprep.subr.mxu0 0.0
    %95 = vmatpush1.msra.mxu0 0.0
    %96 = vmatprep.subr.mxu0 0.0
    %97 = vmatpush1.msra.mxu0 0.0
    %98 = vmatprep.subr.mxu0 0.0
    %99 = vmatpush1.msra.mxu0 0.0
    %100 = vmatprep.subr.mxu0 0.0
    %101 = vmatpush1.msra.mxu0 0.0
    %102 = vmatprep.mubr.f32.mxu0 0.0
    %103 = vmatmul.mubr.f32.gmra.mrb[0].mxu0 %v36
    %v104 = vpop.f32.mrb[0].mxu0
    %v105 = vadd.f32 %v33, %v104
    %v106 = vpop.f32.mrb[0].mxu0
    %107 = vdwg.mxu0
    %vm108 = vcmask 130048
    %v109 = vsel %vm108, %v105, 0.0
    %v110 = vrot.slane %v109, 4
    %v111 = vadd.f32 %v109, %v110
    %v112 = vrot.slane %v111, 2
    %v113 = vadd.f32 %v111, %v112
    %v114 = vrot.slane %v113, 1
    %v115 = vadd.f32 %v113, %v114
    %v116 = vrcp.pop 8.0
    %v117 = vmul.f32 %v115, %v116
    %v118 = vsub.f32 %v105, %v117
    %v119 = vmul.f32 %v118, %v118
    %v120 = vsel %vm108, %v119, 0.0
    %v121 = vrot.slane %v120, 4
    %v122 = vadd.f32 %v120, %v121
    %v123 = vrot.slane %v122, 2
    %v124 = vadd.f32 %v122, %v123
    %v125 = vrot.slane %v124, 1
    %v126 = vadd.f32 %v124, %v125
    %v127 = vmul.f32 %v126, %v116
    %v128 = vadd.f32 %v127, 1e-05
    %v129 = vrsqrt.pop %v128
    %v130 = vmul.f32 %v118, %v129
    %v131 = vld [vmem:[%s3 + $0x1] sm:$0x1]
    %v132 = vlaneseq
    %v133 = vshrl.u32 %v132, 7
    %v134 = vsub.s32 0, %v133
    %v135 = vrot.slane %v131, %v134
    %v136 = vmul.f32 %v130, %v135
    %v137 = vld [vmem:[%s3 + $0x2] sm:$0x1]
    %v138 = vlaneseq
    %v139 = vshrl.u32 %v138, 7
    %v140 = vsub.s32 0, %v139
    %v141 = vrot.slane %v137, %v140
    %v142 = vadd.f32 %v136, %v141
    %vm143 = vcmp.ge.f32.partialorder %v142, 0.0
    %v144 = vmul.f32 %v142, 0.1
    %v145 = vsel %vm143, %v142, %v144
    %v146 = vld [vmem:[%s4] sm:$0xff]
    %v147 = vld [vmem:[%s4 + $0x8] sm:$0xff]
    %v148 = vld [vmem:[%s5] sm:$0x1]
    %v150 = vlaneseq
    %v151 = vshrl.u32 %v150, 7
    %v152 = vsub.s32 0, %v151
    %v153 = vrot.slane %v148, %v152
    %v156 = vsel %vm108, %v145, 0
    %158 = vmatprep.subr.mxu0 0.0
    %159 = vmatpush1.msra.mxu0 %v146
    %160 = vmatprep.subr.mxu0 0.0
    %161 = vmatpush1.msra.mxu0 %v147
    %162 = vmatprep.subr.mxu0 0.0
    %163 = vmatpush1.msra.mxu0 0.0
    %164 = vmatprep.subr.mxu0 0.0
    %165 = vmatpush1.msra.mxu0 0.0
    %166 = vmatprep.subr.mxu0 0.0
    %167 = vmatpush1.msra.mxu0 0.0
    %168 = vmatprep.subr.mxu0 0.0
    %169 = vmatpush1.msra.mxu0 0.0
    %170 = vmatprep.subr.mxu0 0.0
    %171 = vmatpush1.msra.mxu0 0.0
    %172 = vmatprep.subr.mxu0 0.0
    %173 = vmatpush1.msra.mxu0 0.0
    %174 = vmatprep.subr.mxu0 0.0
    %175 = vmatpush1.msra.mxu0 0.0
    %176 = vmatprep.subr.mxu0 0.0
    %177 = vmatpush1.msra.mxu0 0.0
    %178 = vmatprep.subr.mxu0 0.0
    %179 = vmatpush1.msra.mxu0 0.0
    %180 = vmatprep.subr.mxu0 0.0
    %181 = vmatpush1.msra.mxu0 0.0
    %182 = vmatprep.subr.mxu0 0.0
    %183 = vmatpush1.msra.mxu0 0.0
    %184 = vmatprep.subr.mxu0 0.0
    %185 = vmatpush1.msra.mxu0 0.0
    %186 = vmatprep.subr.mxu0 0.0
    %187 = vmatpush1.msra.mxu0 0.0
    %188 = vmatprep.subr.mxu0 0.0
    %189 = vmatpush1.msra.mxu0 0.0
    %190 = vmatprep.subr.mxu0 0.0
    %191 = vmatpush1.msra.mxu0 0.0
    %192 = vmatprep.subr.mxu0 0.0
    %193 = vmatpush1.msra.mxu0 0.0
    %194 = vmatprep.subr.mxu0 0.0
    %195 = vmatpush1.msra.mxu0 0.0
    %196 = vmatprep.subr.mxu0 0.0
    %197 = vmatpush1.msra.mxu0 0.0
    %198 = vmatprep.subr.mxu0 0.0
    %199 = vmatpush1.msra.mxu0 0.0
    %200 = vmatprep.subr.mxu0 0.0
    %201 = vmatpush1.msra.mxu0 0.0
    %202 = vmatprep.subr.mxu0 0.0
    %203 = vmatpush1.msra.mxu0 0.0
    %204 = vmatprep.subr.mxu0 0.0
    %205 = vmatpush1.msra.mxu0 0.0
    %206 = vmatprep.subr.mxu0 0.0
    %207 = vmatpush1.msra.mxu0 0.0
    %208 = vmatprep.subr.mxu0 0.0
    %209 = vmatpush1.msra.mxu0 0.0
    %210 = vmatprep.subr.mxu0 0.0
    %211 = vmatpush1.msra.mxu0 0.0
    %212 = vmatprep.subr.mxu0 0.0
    %213 = vmatpush1.msra.mxu0 0.0
    %214 = vmatprep.subr.mxu0 0.0
    %215 = vmatpush1.msra.mxu0 0.0
    %216 = vmatprep.subr.mxu0 0.0
    %217 = vmatpush1.msra.mxu0 0.0
    %218 = vmatprep.subr.mxu0 0.0
    %219 = vmatpush1.msra.mxu0 0.0
    %220 = vmatprep.subr.mxu0 0.0
    %221 = vmatpush1.msra.mxu0 0.0
    %222 = vmatprep.mubr.f32.mxu0 0.0
    %223 = vmatmul.mubr.f32.gmra.mrb[0].mxu0 %v156
    %v224 = vpop.f32.mrb[0].mxu0
    %v225 = vadd.f32 %v153, %v224
    %v226 = vpop.f32.mrb[0].mxu0
    %227 = vdwg.mxu0
    %vm228 = vcmp.gt.f32.partialorder %v225, 20.0
    %v229 = vmin.f32 %v225, 20.0
    %v230 = vmul.f32 %v229, 1.442695
    %v231 = vpow.pop %v230
    %v232 = vadd.f32 %v231, 1.0
    %v233 = vlog2.pop %v232
    %v234 = vmul.f32 %v233, 0.6931472
    %v235 = vmul.f32 -0.5, %v231
    %v236 = vadd.f32 %v235, 1.0
    %v237 = vmul.f32 %v236, %v231
    %v238 = vand.u32 2147483647, %v231
    %vm239 = vcmp.lt.f32.partialorder %v238, 0.0004427343
    %v240 = vsel %vm239, %v237, %v234
    %v241 = vsel %vm228, %v225, %v240
    %v242 = vmul.f32 %v241, 0.5
    %v243 = vmul.f32 %v242, 1.442695
    %v244 = vpow.pop %v243
    %v245 = vld [vmem:[%s1] sm:$0xff]
    %247 = vrot.lane.b32.xlu0 %v245, 8
    %v248 = vpop.permute.xlu0 %247
    %v250 = vmul.f32 %v244, %v248
    %252 = vrot.lane.b32.xlu0 %v250, 120
    %v253 = vpop.permute.xlu0 %252
    %v255 = vadd.f32 %v225, %v253
    %256 = vst.msk [vmem:[#allocation2] sm:$0xff] %vm108, %v145
    %258 = vrot.lane.b32.xlu0 %v255, 16
    %v259 = vpop.permute.xlu0 %258
    %vm261 = vcmask 195712
    %262 = vst.msk [vmem:[#allocation2] sm:$0xff] %vm261, %v259
    %264 = vrot.lane.b32.xlu0 %v225, 24
    %v265 = vpop.permute.xlu0 %264
    %vm267 = vcmask 261312
    %268 = vst.msk [vmem:[#allocation2] sm:$0xff] %vm267, %v265
    %270 = vrot.lane.b32.xlu0 %v241, 24
    %v271 = vpop.permute.xlu0 %270
    %vm273 = vcmask 326912
    %274 = vst.msk [vmem:[#allocation2] sm:$0xff] %vm273, %v271
    // Predicated region
    $region26: #{tpu_custom_call.1} parent=1 // pred_check
      _
    $region27: #{tpu_custom_call.1} parent=1 // pred_check_branch
      %276 = sbr.rel (0) target = $region29
    $region28: #{tpu_custom_call.1} parent=1 // pred_region
      %s278 = ssub.s32 128, 128
      %279 = vsyncadd [#allocation3], %s278
      %s281 = sshll.u32 [#allocation2], 4
      %s282 = int_to_ptr.vmem [resolvable:$true] %s281
      %284 = dma.vmem_to_hbm [thread:$0]  %s282, 128, %s6, [#allocation3]
    $region29: #{tpu_custom_call.1} parent=1 // pred_fallthru
      _
    // Predicated region
    $region30: #{tpu_custom_call.1} parent=1 // pred_check
      _
    $region31: #{tpu_custom_call.1} parent=1 // pred_check_branch
      %286 = sbr.rel (0) target = $region33
    $region32: #{tpu_custom_call.1} parent=1 // pred_region
      %287 = dma.done [#allocation3], 128
    $region33: #{tpu_custom_call.1} parent=1 // pred_fallthru
      _
    %288 = vsyncpa [#allocation3], 1

</llo_original>
